<compile_context>
chip_gen: v5e
topology: v5e:2x2
jax: 0.10.0
libtpu: 0.0.40
codegen_flags: <defaults>
</compile_context>

<pallas_src>
import jax
import jax.numpy as jnp
from jax import lax
from jax.experimental import pallas as pl
from jax.experimental.pallas import tpu as pltpu


def _tensorcores_per_chip():
    """Heuristic: 2 TensorCores on v7x / v4 / v5p, 1 on v5e / v6e."""
    try:
        kind = jax.devices()[0].device_kind.lower()
    except Exception:
        return 1
    return 2 if any(t in kind for t in ("v7", "v4", "v5p")) else 1


def _make_split_block_kernel(H, W, Cin, Cout, K, PAD, B):
    """Per-grid-step kernel body; B images per step, shapes baked in statically."""
    HW = H * W
    L = B * HW  # merged lane width for this grid step

    def kernel(x_ref, w_ref, mask_ref, beff_ref, o_ref):
        # Merge the B images of this step onto the lane axis: (Cin, B*HW).
        if B == 1:
            xl = x_ref[0]
        else:
            xl = jnp.concatenate([x_ref[b] for b in range(B)], axis=1)

        # im2col via XLU lane rotates + precomputed border masks.  Rolling across
        # an image seam only pollutes positions whose mask is already zero.
        parts = []
        for di in range(K):
            for dj in range(K):
                t = di * K + dj
                s = (di - PAD) * W + (dj - PAD)      # shift in flattened index
                if s == 0:
                    shifted = xl
                else:
                    shifted = pltpu.roll(xl, shift=(-s) % L, axis=1)
                parts.append(shifted * mask_ref[pl.ds(t, 1), :])   # (Cin, L)
        stack = jnp.concatenate(parts, axis=0)        # (K*K*Cin, B*HW)

        # Single fused MXU contraction (1x1 conv already folded into w_ref).
        out = jnp.dot(w_ref[...], stack, preferred_element_type=jnp.float32)
        out = out + beff_ref[...]                     # per-position effective bias

        # Lane-dense stores, one (Cout, HW) slab per image.
        for b in range(B):
            o_ref[b] = out[:, b * HW:(b + 1) * HW].astype(o_ref.dtype)

    return kernel


def split_block_forward(x_nchw, w1, b1, w2, b2):
    """x_nchw: (N, Cin, H, W). w1: (Cmid, Cin, 1, 1). w2: (Cout, Cmid, K, K)."""
    N, Cin, H, W = x_nchw.shape
    Cout = w2.shape[0]
    K = w2.shape[-1]
    PAD = K // 2
    HW = H * W
    hi = lax.Precision.HIGHEST

    # ---- host-side parameter prep (tiny, exact f32) -------------------------
    # Fuse conv1x1 into the KxK weights: (Cout, K, K, Cin) -> (Cout, K*K*Cin),
    # column order (di*K+dj)*Cin + c matches the in-kernel im2col stacking.
    w1_2d = w1[:, :, 0, 0]                                         # (Cmid, Cin)
    w_fused = jnp.einsum("omyx,mc->oyxc", w2, w1_2d, precision=hi)
    w_fused = w_fused.reshape(Cout, K * K * Cin).astype(jnp.float32)

    # Border validity masks, (K*K, HW).
    idx = jnp.arange(HW, dtype=jnp.int32)
    ii, jj = idx // W, idx % W
    masks = []
    for di in range(K):
        for dj in range(K):
            oi, oj = di - PAD, dj - PAD
            valid = (ii + oi >= 0) & (ii + oi < H) & (jj + oj >= 0) & (jj + oj < W)
            masks.append(valid.astype(jnp.float32))
    mask = jnp.stack(masks, axis=0)                                # (K*K, HW)

    # Effective per-position bias map: b2 + sum_{valid taps} w2_tap @ b1.
    wtap_b1 = jnp.einsum("omyx,m->oyx", w2, b1, precision=hi).reshape(Cout, K * K)
    b_eff = b2[:, None] + jnp.dot(wtap_b1, mask, precision=hi)     # (Cout, HW)

    # ---- batch folding / grid sizing ----------------------------------------
    cores = _tensorcores_per_chip()
    steps = cores if (cores > 1 and N >= cores) else 1
    B = (N + steps - 1) // steps                 # images per grid step
    Np = B * steps

    x = x_nchw.reshape(N, Cin, HW)               # free reshape, no transposes
    if Np != N:
        x = jnp.concatenate([x, jnp.zeros((Np - N, Cin, HW), x.dtype)], axis=0)

    mask_t = jnp.tile(mask, (1, B))                        # (K*K, B*HW)
    beff_t = jnp.tile(b_eff.astype(jnp.float32), (1, B))   # (Cout, B*HW)

    kernel = _make_split_block_kernel(H, W, Cin, Cout, K, PAD, B)

    out = pl.pallas_call(
        kernel,
        out_shape=jax.ShapeDtypeStruct((Np, Cout, HW), x.dtype),
        grid=(steps,),
        in_specs=[
            pl.BlockSpec((B, Cin, HW), lambda n: (n, 0, 0)),
            pl.BlockSpec((Cout, K * K * Cin), lambda n: (0, 0)),
            pl.BlockSpec((K * K, B * HW), lambda n: (0, 0)),
            pl.BlockSpec((Cout, B * HW), lambda n: (0, 0)),
        ],
        out_specs=pl.BlockSpec((B, Cout, HW), lambda n: (n, 0, 0)),
        compiler_params=pltpu.CompilerParams(
            dimension_semantics=("parallel",),
        ),
    )(x, w_fused, mask_t, beff_t)

    return out[:N].reshape(N, Cout, H, W)


def split_block_reference(x_nchw, w1, b1, w2, b2):
    """Pure-JAX NCHW reference mirroring the PyTorch module exactly."""
    K = w2.shape[-1]
    PAD = K // 2
    dn = ("NCHW", "OIHW", "NCHW")
    y = lax.conv_general_dilated(x_nchw, w1, (1, 1), "VALID", dimension_numbers=dn)
    y = y + b1[None, :, None, None]
    y = lax.conv_general_dilated(y, w2, (1, 1), [(PAD, PAD), (PAD, PAD)],
                                 dimension_numbers=dn)
    y = y + b2[None, :, None, None]
    return y


if __name__ == "__main__":
    # Small shapes consistent with the module: input_dim=8, number=3.
    N, C, H, W = 2, 8, 16, 16
    K = 3

    key = jax.random.PRNGKey(0)
    kx, k1, kb1, k2, kb2 = jax.random.split(key, 5)

    x = jax.random.normal(kx, (N, C, H, W), dtype=jnp.float32)
    w1 = jax.random.normal(k1, (C, C, 1, 1), dtype=jnp.float32) * 0.1
    b1 = jax.random.normal(kb1, (C,), dtype=jnp.float32) * 0.1
    w2 = jax.random.normal(k2, (C, C, K, K), dtype=jnp.float32) * 0.1
    b2 = jax.random.normal(kb2, (C,), dtype=jnp.float32) * 0.1

    out = split_block_forward(x, w1, b1, w2, b2)
    out = jax.block_until_ready(out)

    ref = split_block_reference(x, w1, b1, w2, b2)
    assert out.shape == ref.shape == (N, C, H, W)
    # Host-side weight fusion reassociates the two convolutions; tolerance covers
    # that plus matmul-pass rounding.  Errors from a wrong kernel would be O(1).
    max_err = float(jnp.max(jnp.abs(out - ref)))
    assert jnp.allclose(out, ref, atol=1e-3, rtol=1e-3), max_err

    print("KERNEL_OK")
</pallas_src>

<mosaic_0001>
module attributes {stable_mosaic.version = 11 : i64} {
  func.func @kernel(%arg0: i32, %arg1: memref<2x8x256xf32, #tpu.memory_space<vmem>>, %arg2: memref<8x72xf32, #tpu.memory_space<vmem>>, %arg3: memref<9x512xf32, #tpu.memory_space<vmem>>, %arg4: memref<8x512xf32, #tpu.memory_space<vmem>>, %arg5: memref<2x8x256xf32, #tpu.memory_space<vmem>>) attributes {dimension_semantics = [#tpu.dimension_semantics<parallel>], iteration_bounds = array<i64: 1>, scalar_prefetch = 0 : i64, scratch_operands = 0 : i64, tpu.core_type = #tpu.core_type<tc>, window_params = [{transform_indices = @transform_0, window_bounds = array<i64: 2, 8, 256>}, {pipeline_mode = #tpu.pipeline_mode<synchronous>, transform_indices = @transform_1, window_bounds = array<i64: 8, 72>}, {pipeline_mode = #tpu.pipeline_mode<synchronous>, transform_indices = @transform_2, window_bounds = array<i64: 9, 512>}, {pipeline_mode = #tpu.pipeline_mode<synchronous>, transform_indices = @transform_3, window_bounds = array<i64: 8, 512>}, {transform_indices = @transform_4, window_bounds = array<i64: 2, 8, 256>}]} {
    %c0 = arith.constant 0 : index
    %c0_0 = arith.constant 0 : index
    %c0_1 = arith.constant 0 : index
    %0 = vector.load %arg1[%c0, %c0_0, %c0_1] : memref<2x8x256xf32, #tpu.memory_space<vmem>>, vector<1x8x256xf32>
    %1 = vector.shape_cast %0 : vector<1x8x256xf32> to vector<8x256xf32>
    %c1 = arith.constant 1 : index
    %c0_2 = arith.constant 0 : index
    %c0_3 = arith.constant 0 : index
    %2 = vector.load %arg1[%c1, %c0_2, %c0_3] : memref<2x8x256xf32, #tpu.memory_space<vmem>>, vector<1x8x256xf32>
    %3 = vector.shape_cast %2 : vector<1x8x256xf32> to vector<8x256xf32>
    %4 = tpu.concatenate %1, %3 in 1 : vector<8x256xf32>, vector<8x256xf32> -> vector<8x512xf32>
    %c17_i32 = arith.constant 17 : i32
    %5 = tpu.dynamic_rotate %4 by %c17_i32 dim 1 : vector<8x512xf32>, i32 -> vector<8x512xf32>
    %c0_4 = arith.constant 0 : index
    %c0_5 = arith.constant 0 : index
    %6 = vector.load %arg3[%c0_4, %c0_5] : memref<9x512xf32, #tpu.memory_space<vmem>>, vector<1x512xf32>
    %7 = vector.broadcast %6 : vector<1x512xf32> to vector<8x512xf32>
    %8 = arith.mulf %5, %7 : vector<8x512xf32>
    %c16_i32 = arith.constant 16 : i32
    %9 = tpu.dynamic_rotate %4 by %c16_i32 dim 1 : vector<8x512xf32>, i32 -> vector<8x512xf32>
    %c1_6 = arith.constant 1 : index
    %c0_7 = arith.constant 0 : index
    %10 = vector.load %arg3[%c1_6, %c0_7] : memref<9x512xf32, #tpu.memory_space<vmem>>, vector<1x512xf32>
    %11 = vector.broadcast %10 : vector<1x512xf32> to vector<8x512xf32>
    %12 = arith.mulf %9, %11 : vector<8x512xf32>
    %c15_i32 = arith.constant 15 : i32
    %13 = tpu.dynamic_rotate %4 by %c15_i32 dim 1 : vector<8x512xf32>, i32 -> vector<8x512xf32>
    %c2 = arith.constant 2 : index
    %c0_8 = arith.constant 0 : index
    %14 = vector.load %arg3[%c2, %c0_8] : memref<9x512xf32, #tpu.memory_space<vmem>>, vector<1x512xf32>
    %15 = vector.broadcast %14 : vector<1x512xf32> to vector<8x512xf32>
    %16 = arith.mulf %13, %15 : vector<8x512xf32>
    %c1_i32 = arith.constant 1 : i32
    %17 = tpu.dynamic_rotate %4 by %c1_i32 dim 1 : vector<8x512xf32>, i32 -> vector<8x512xf32>
    %c3 = arith.constant 3 : index
    %c0_9 = arith.constant 0 : index
    %18 = vector.load %arg3[%c3, %c0_9] : memref<9x512xf32, #tpu.memory_space<vmem>>, vector<1x512xf32>
    %19 = vector.broadcast %18 : vector<1x512xf32> to vector<8x512xf32>
    %20 = arith.mulf %17, %19 : vector<8x512xf32>
    %c4 = arith.constant 4 : index
    %c0_10 = arith.constant 0 : index
    %21 = vector.load %arg3[%c4, %c0_10] : memref<9x512xf32, #tpu.memory_space<vmem>>, vector<1x512xf32>
    %22 = vector.broadcast %21 : vector<1x512xf32> to vector<8x512xf32>
    %23 = arith.mulf %4, %22 : vector<8x512xf32>
    %c511_i32 = arith.constant 511 : i32
    %24 = tpu.dynamic_rotate %4 by %c511_i32 dim 1 : vector<8x512xf32>, i32 -> vector<8x512xf32>
    %c5 = arith.constant 5 : index
    %c0_11 = arith.constant 0 : index
    %25 = vector.load %arg3[%c5, %c0_11] : memref<9x512xf32, #tpu.memory_space<vmem>>, vector<1x512xf32>
    %26 = vector.broadcast %25 : vector<1x512xf32> to vector<8x512xf32>
    %27 = arith.mulf %24, %26 : vector<8x512xf32>
    %c497_i32 = arith.constant 497 : i32
    %28 = tpu.dynamic_rotate %4 by %c497_i32 dim 1 : vector<8x512xf32>, i32 -> vector<8x512xf32>
    %c6 = arith.constant 6 : index
    %c0_12 = arith.constant 0 : index
    %29 = vector.load %arg3[%c6, %c0_12] : memref<9x512xf32, #tpu.memory_space<vmem>>, vector<1x512xf32>
    %30 = vector.broadcast %29 : vector<1x512xf32> to vector<8x512xf32>
    %31 = arith.mulf %28, %30 : vector<8x512xf32>
    %c496_i32 = arith.constant 496 : i32
    %32 = tpu.dynamic_rotate %4 by %c496_i32 dim 1 : vector<8x512xf32>, i32 -> vector<8x512xf32>
    %c7 = arith.constant 7 : index
    %c0_13 = arith.constant 0 : index
    %33 = vector.load %arg3[%c7, %c0_13] : memref<9x512xf32, #tpu.memory_space<vmem>>, vector<1x512xf32>
    %34 = vector.broadcast %33 : vector<1x512xf32> to vector<8x512xf32>
    %35 = arith.mulf %32, %34 : vector<8x512xf32>
    %c495_i32 = arith.constant 495 : i32
    %36 = tpu.dynamic_rotate %4 by %c495_i32 dim 1 : vector<8x512xf32>, i32 -> vector<8x512xf32>
    %c8 = arith.constant 8 : index
    %c0_14 = arith.constant 0 : index
    %37 = vector.load %arg3[%c8, %c0_14] : memref<9x512xf32, #tpu.memory_space<vmem>>, vector<1x512xf32>
    %38 = vector.broadcast %37 : vector<1x512xf32> to vector<8x512xf32>
    %39 = arith.mulf %36, %38 : vector<8x512xf32>
    %40 = tpu.concatenate %8, %12, %16, %20, %23, %27, %31, %35, %39 in 0 : vector<8x512xf32>, vector<8x512xf32>, vector<8x512xf32>, vector<8x512xf32>, vector<8x512xf32>, vector<8x512xf32>, vector<8x512xf32>, vector<8x512xf32>, vector<8x512xf32> -> vector<72x512xf32>
    %c0_15 = arith.constant 0 : index
    %c0_16 = arith.constant 0 : index
    %41 = vector.load %arg2[%c0_15, %c0_16] : memref<8x72xf32, #tpu.memory_space<vmem>>, vector<8x72xf32>
    %cst = arith.constant dense<0.000000e+00> : vector<8x512xf32>
    %42 = tpu.matmul %41, %40, %cst {dimension_numbers = #tpu.dot_dimension_numbers<[1], [0], [0], [1], [0, 0, 1, 1], [], []>} : vector<8x72xf32>, vector<72x512xf32>, vector<8x512xf32> -> vector<8x512xf32>
    %c0_17 = arith.constant 0 : index
    %c0_18 = arith.constant 0 : index
    %43 = vector.load %arg4[%c0_17, %c0_18] : memref<8x512xf32, #tpu.memory_space<vmem>>, vector<8x512xf32>
    %44 = arith.addf %42, %43 : vector<8x512xf32>
    %45 = vector.extract_strided_slice %44 {offsets = [0, 0], sizes = [8, 256], strides = [1, 1]} : vector<8x512xf32> to vector<8x256xf32>
    %c0_19 = arith.constant 0 : index
    %c0_20 = arith.constant 0 : index
    %c0_21 = arith.constant 0 : index
    %46 = vector.load %arg5[%c0_19, %c0_20, %c0_21] : memref<2x8x256xf32, #tpu.memory_space<vmem>>, vector<1x8x256xf32>
    %47 = vector.shape_cast %46 : vector<1x8x256xf32> to vector<8x256xf32>
    %48 = vector.shape_cast %45 : vector<8x256xf32> to vector<1x8x256xf32>
    tpu.vector_store %arg5[%c0_19, %c0_20, %c0_21], %48 {strides = array<i32>} : memref<2x8x256xf32, #tpu.memory_space<vmem>>, vector<1x8x256xf32>,
    %49 = vector.extract_strided_slice %44 {offsets = [0, 256], sizes = [8, 256], strides = [1, 1]} : vector<8x512xf32> to vector<8x256xf32>
    %c1_22 = arith.constant 1 : index
    %c0_23 = arith.constant 0 : index
    %c0_24 = arith.constant 0 : index
    %50 = vector.load %arg5[%c1_22, %c0_23, %c0_24] : memref<2x8x256xf32, #tpu.memory_space<vmem>>, vector<1x8x256xf32>
    %51 = vector.shape_cast %50 : vector<1x8x256xf32> to vector<8x256xf32>
    %52 = vector.shape_cast %49 : vector<8x256xf32> to vector<1x8x256xf32>
    tpu.vector_store %arg5[%c1_22, %c0_23, %c0_24], %52 {strides = array<i32>} : memref<2x8x256xf32, #tpu.memory_space<vmem>>, vector<1x8x256xf32>,
    return
  }
  func.func @transform_0(%arg0: i32) -> (i32, i32, i32) {
    %c0_i32 = arith.constant 0 : i32
    %c0_i32_0 = arith.constant 0 : i32
    %c0_i32_1 = arith.constant 0 : i32
    return %arg0, %c0_i32, %c0_i32_0 : i32, i32, i32
  }
  func.func @transform_1(%arg0: i32) -> (i32, i32) {
    %c0_i32 = arith.constant 0 : i32
    %c0_i32_0 = arith.constant 0 : i32
    %c0_i32_1 = arith.constant 0 : i32
    return %c0_i32, %c0_i32_0 : i32, i32
  }
  func.func @transform_2(%arg0: i32) -> (i32, i32) {
    %c0_i32 = arith.constant 0 : i32
    %c0_i32_0 = arith.constant 0 : i32
    %c0_i32_1 = arith.constant 0 : i32
    return %c0_i32, %c0_i32_0 : i32, i32
  }
  func.func @transform_3(%arg0: i32) -> (i32, i32) {
    %c0_i32 = arith.constant 0 : i32
    %c0_i32_0 = arith.constant 0 : i32
    %c0_i32_1 = arith.constant 0 : i32
    return %c0_i32, %c0_i32_0 : i32, i32
  }
  func.func @transform_4(%arg0: i32) -> (i32, i32, i32) {
    %c0_i32 = arith.constant 0 : i32
    %c0_i32_0 = arith.constant 0 : i32
    %c0_i32_1 = arith.constant 0 : i32
    return %arg0, %c0_i32, %c0_i32_0 : i32, i32, i32
  }
}

</mosaic_0001>

<llo_original>
// kernel: tpu_custom_call.1
$region0: #{tpu_custom_call.1}
  #allocation0 [shape = 'u32[]', space=smem, size = 0x4, offset = 0x4, fixed_abs, tag = 'smem constant byte address 0x4 - core index']
  #allocation1 [shape = 'u32[72,128]{1,0:T(1,128)}', space=vmem, size = 0x9000, scoped, tag = 'internal scratch']
  %s0 = inlined_call_operand.hbm [shape: f32[2,8,256], index: 0, kind: input, shape index: {}]
  %s1 = inlined_call_operand.hbm [shape: f32[8,72], index: 1, kind: input, shape index: {}]
  %s2 = inlined_call_operand.hbm [shape: f32[9,512], index: 2, kind: input, shape index: {}]
  %s3 = inlined_call_operand.hbm [shape: f32[8,512], index: 3, kind: input, shape index: {}]
  %s4 = inlined_call_operand.hbm [shape: f32[2,8,256], index: 4, kind: output, shape index: {}]
  %s5 = sld [smem:[#allocation0]]
  $region42: #{tpu_custom_call.1} parent=0
    _
  %s7 = ssub.s32 1, %s5
  %s8 = scalar_select 0, %s7, %s5
  $region1: #{tpu_custom_call.1} parent=0
    #allocation2 [shape = 'u8[16384]{0}', space=vmem, size = 0x4000, scoped, tag = 'input window, operand 0, single buffered']
    #allocation3 [shape = 's32[1]{0}', space=sflag, size = 0x4, scoped, tag = 'scoped memory for tpu_custom_call.1']
    #allocation4 [shape = 's32[1]{0}', space=sflag, size = 0x4, scoped, tag = 'scoped memory for tpu_custom_call.1']
    #allocation5 [shape = 'u8[4096]{0}', space=vmem, size = 0x1000, scoped, tag = 'input window, operand 1, single buffered']
    #allocation6 [shape = 's32[1]{0}', space=sflag, size = 0x4, scoped, tag = 'scoped memory for tpu_custom_call.1']
    #allocation7 [shape = 'u8[32768]{0}', space=vmem, size = 0x8000, scoped, tag = 'input window, operand 2, single buffered']
    #allocation8 [shape = 'u8[16384]{0}', space=vmem, size = 0x4000, scoped, tag = 'input window, operand 3, single buffered']
    #allocation9 [shape = 's32[1]{0}', space=sflag, size = 0x4, scoped, tag = 'scoped memory for tpu_custom_call.1']
    #allocation10 [shape = 'u8[16384]{0}', space=vmem, size = 0x4000, scoped, tag = 'output window, operand 0, single buffered']
    %9 = vsyncpa [#allocation3], 0
    %10 = vsyncpa [#allocation6], 0
    %11 = vsyncpa [#allocation9], 0
    %12 = vsyncpa [#allocation4], 0
    // Predicated region
    $region2: #{tpu_custom_call.1} parent=1 // pred_check
      _
    $region3: #{tpu_custom_call.1} parent=1 // pred_check_branch
      %14 = sbr.rel (0) target = $region5
    $region4: #{tpu_custom_call.1} parent=1 // pred_region
      %16 = vsyncadd [#allocation3], 0
      %s17 = sshll.u32 %s0, 4
      %s18 = int_to_ptr.hbm [resolvable:$true] %s17
      %s19 = sshll.u32 [#allocation2], 4
      %s20 = int_to_ptr.vmem [resolvable:$true] %s19
      %25 = dma.hbm_to_vmem [thread:$0]  %s18, 512, %s20, [#allocation3], 256, 256, 16
    $region5: #{tpu_custom_call.1} parent=1 // pred_fallthru
      _
    // Predicated region
    $region6: #{tpu_custom_call.1} parent=1 // pred_check
      _
    $region7: #{tpu_custom_call.1} parent=1 // pred_check_branch
      %27 = sbr.rel (0) target = $region9
    $region8: #{tpu_custom_call.1} parent=1 // pred_region
      %29 = vsyncadd [#allocation6], 0
      %s31 = sshll.u32 %s1, 4
      %s32 = int_to_ptr.hbm [resolvable:$true] %s31
      %s33 = sshll.u32 [#allocation5], 4
      %s34 = int_to_ptr.vmem [resolvable:$true] %s33
      %36 = dma.hbm_to_vmem [thread:$0]  %s32, 128, %s34, [#allocation6]
    $region9: #{tpu_custom_call.1} parent=1 // pred_fallthru
      _
    // Predicated region
    $region10: #{tpu_custom_call.1} parent=1 // pred_check
      _
    $region11: #{tpu_custom_call.1} parent=1 // pred_check_branch
      %38 = sbr.rel (0) target = $region13
    $region12: #{tpu_custom_call.1} parent=1 // pred_region
      %40 = vsyncadd [#allocation6], 0
      %s41 = sshll.u32 %s2, 4
      %s42 = int_to_ptr.hbm [resolvable:$true] %s41
      %s43 = sshll.u32 [#allocation7], 4
      %s44 = int_to_ptr.vmem [resolvable:$true] %s43
      %49 = dma.hbm_to_vmem [thread:$0]  %s42, 1024, %s44, [#allocation6], 512, 512, 32
    $region13: #{tpu_custom_call.1} parent=1 // pred_fallthru
      _
    // Predicated region
    $region14: #{tpu_custom_call.1} parent=1 // pred_check
      _
    $region15: #{tpu_custom_call.1} parent=1 // pred_check_branch
      %51 = sbr.rel (0) target = $region17
    $region16: #{tpu_custom_call.1} parent=1 // pred_region
      %53 = vsyncadd [#allocation9], 0
      %s55 = sshll.u32 %s3, 4
      %s56 = int_to_ptr.hbm [resolvable:$true] %s55
      %s57 = sshll.u32 [#allocation8], 4
      %s58 = int_to_ptr.vmem [resolvable:$true] %s57
      %60 = dma.hbm_to_vmem [thread:$0]  %s56, 512, %s58, [#allocation9]
    $region17: #{tpu_custom_call.1} parent=1 // pred_fallthru
      _
    // Predicated region
    $region18: #{tpu_custom_call.1} parent=1 // pred_check
      _
    $region19: #{tpu_custom_call.1} parent=1 // pred_check_branch
      %62 = sbr.rel (0) target = $region21
    $region20: #{tpu_custom_call.1} parent=1 // pred_region
      %64 = dma.done [#allocation3], 512
    $region21: #{tpu_custom_call.1} parent=1 // pred_fallthru
      _
    // Predicated region
    $region22: #{tpu_custom_call.1} parent=1 // pred_check
      _
    $region23: #{tpu_custom_call.1} parent=1 // pred_check_branch
      %66 = sbr.rel (0) target = $region25
    $region24: #{tpu_custom_call.1} parent=1 // pred_region
      %68 = dma.done [#allocation6], 128
    $region25: #{tpu_custom_call.1} parent=1 // pred_fallthru
      _
    // Predicated region
    $region26: #{tpu_custom_call.1} parent=1 // pred_check
      _
    $region27: #{tpu_custom_call.1} parent=1 // pred_check_branch
      %70 = sbr.rel (0) target = $region29
    $region28: #{tpu_custom_call.1} parent=1 // pred_region
      %72 = dma.done [#allocation6], 1024
    $region29: #{tpu_custom_call.1} parent=1 // pred_fallthru
      _
    // Predicated region
    $region30: #{tpu_custom_call.1} parent=1 // pred_check
      _
    $region31: #{tpu_custom_call.1} parent=1 // pred_check_branch
      %74 = sbr.rel (0) target = $region33
    $region32: #{tpu_custom_call.1} parent=1 // pred_region
      %76 = dma.done [#allocation9], 512
    $region33: #{tpu_custom_call.1} parent=1 // pred_fallthru
      _
    %v77 = vld [vmem:[#allocation2] sm:$0xff]
    %v78 = vld [vmem:[#allocation2 + $0x8] sm:$0xff]
    %s79 = scalar_lea.vmem [#allocation2], 16
    %v80 = vld [vmem:[%s79] sm:$0xff]
    %v81 = vld [vmem:[%s79 + $0x8] sm:$0xff]
    %82 = vrot.lane.b32.xlu0 %v77, 17
    %v83 = vpop.permute.xlu0 %82
    %84 = vrot.lane.b32.xlu0 %v78, 17
    %v85 = vpop.permute.xlu0 %84
    %86 = vrot.lane.b32.xlu0 %v80, 17
    %v87 = vpop.permute.xlu0 %86
    %88 = vrot.lane.b32.xlu0 %v81, 17
    %v89 = vpop.permute.xlu0 %88
    %v90 = vlaneseq
    %v91 = vand.u32 %v90, 127
    %vm92 = vcmp.lt.s32.totalorder %v91, 17
    %v93 = vsel %vm92, %v87, %v89
    %v94 = vsel %vm92, %v85, %v87
    %v95 = vsel %vm92, %v83, %v85
    %v96 = vsel %vm92, %v89, %v83
    %v97 = vld [vmem:[#allocation7] ss:$8 sm:$0xf]
    %v99 = vperm.slane %v97, 0
    %v100 = vperm.slane %v97, 1
    %v101 = vperm.slane %v97, 2
    %v102 = vperm.slane %v97, 3
    %v107 = vmul.f32 %v96, %v99
    %v108 = vmul.f32 %v95, %v100
    %v109 = vmul.f32 %v94, %v101
    %v110 = vmul.f32 %v93, %v102
    %111 = vrot.lane.b32.xlu0 %v77, 16
    %v112 = vpop.permute.xlu0 %111
    %113 = vrot.lane.b32.xlu0 %v78, 16
    %v114 = vpop.permute.xlu0 %113
    %115 = vrot.lane.b32.xlu0 %v80, 16
    %v116 = vpop.permute.xlu0 %115
    %117 = vrot.lane.b32.xlu0 %v81, 16
    %v118 = vpop.permute.xlu0 %117
    %vm119 = vcmp.lt.s32.totalorder %v91, 16
    %v120 = vsel %vm119, %v116, %v118
    %v121 = vsel %vm119, %v114, %v116
    %v122 = vsel %vm119, %v112, %v114
    %v123 = vsel %vm119, %v118, %v112
    %s124 = scalar_lea.vmem [#allocation7], 1
    %v125 = vld [vmem:[%s124] ss:$8 sm:$0xf]
    %v127 = vperm.slane %v125, 0
    %v128 = vperm.slane %v125, 1
    %v129 = vperm.slane %v125, 2
    %v130 = vperm.slane %v125, 3
    %v135 = vmul.f32 %v123, %v127
    %v136 = vmul.f32 %v122, %v128
    %v137 = vmul.f32 %v121, %v129
    %v138 = vmul.f32 %v120, %v130
    %139 = vrot.lane.b32.xlu0 %v77, 15
    %v140 = vpop.permute.xlu0 %139
    %141 = vrot.lane.b32.xlu0 %v78, 15
    %v142 = vpop.permute.xlu0 %141
    %143 = vrot.lane.b32.xlu0 %v80, 15
    %v144 = vpop.permute.xlu0 %143
    %145 = vrot.lane.b32.xlu0 %v81, 15
    %v146 = vpop.permute.xlu0 %145
    %vm147 = vcmp.lt.s32.totalorder %v91, 15
    %v148 = vsel %vm147, %v144, %v146
    %v149 = vsel %vm147, %v142, %v144
    %v150 = vsel %vm147, %v140, %v142
    %v151 = vsel %vm147, %v146, %v140
    %s152 = scalar_lea.vmem [#allocation7], 2
    %v153 = vld [vmem:[%s152] ss:$8 sm:$0xf]
    %v155 = vperm.slane %v153, 0
    %v156 = vperm.slane %v153, 1
    %v157 = vperm.slane %v153, 2
    %v158 = vperm.slane %v153, 3
    %v163 = vmul.f32 %v151, %v155
    %v164 = vmul.f32 %v150, %v156
    %v165 = vmul.f32 %v149, %v157
    %v166 = vmul.f32 %v148, %v158
    %167 = vrot.lane.b32.xlu0 %v77, 1
    %v168 = vpop.permute.xlu0 %167
    %169 = vrot.lane.b32.xlu0 %v78, 1
    %v170 = vpop.permute.xlu0 %169
    %171 = vrot.lane.b32.xlu0 %v80, 1
    %v172 = vpop.permute.xlu0 %171
    %173 = vrot.lane.b32.xlu0 %v81, 1
    %v174 = vpop.permute.xlu0 %173
    %vm175 = vcmp.lt.s32.totalorder %v91, 1
    %v176 = vsel %vm175, %v172, %v174
    %v177 = vsel %vm175, %v170, %v172
    %v178 = vsel %vm175, %v168, %v170
    %v179 = vsel %vm175, %v174, %v168
    %s180 = scalar_lea.vmem [#allocation7], 3
    %v181 = vld [vmem:[%s180] ss:$8 sm:$0xf]
    %v183 = vperm.slane %v181, 0
    %v184 = vperm.slane %v181, 1
    %v185 = vperm.slane %v181, 2
    %v186 = vperm.slane %v181, 3
    %v191 = vmul.f32 %v179, %v183
    %v192 = vmul.f32 %v178, %v184
    %v193 = vmul.f32 %v177, %v185
    %v194 = vmul.f32 %v176, %v186
    %s195 = scalar_lea.vmem [#allocation7], 4
    %v196 = vld [vmem:[%s195] ss:$8 sm:$0xf]
    %v198 = vperm.slane %v196, 0
    %v199 = vperm.slane %v196, 1
    %v200 = vperm.slane %v196, 2
    %v201 = vperm.slane %v196, 3
    %v206 = vmul.f32 %v77, %v198
    %v207 = vmul.f32 %v78, %v199
    %v208 = vmul.f32 %v80, %v200
    %v209 = vmul.f32 %v81, %v201
    %210 = vrot.lane.b32.xlu0 %v77, 127
    %v211 = vpop.permute.xlu0 %210
    %212 = vrot.lane.b32.xlu0 %v78, 127
    %v213 = vpop.permute.xlu0 %212
    %214 = vrot.lane.b32.xlu0 %v80, 127
    %v215 = vpop.permute.xlu0 %214
    %216 = vrot.lane.b32.xlu0 %v81, 127
    %v217 = vpop.permute.xlu0 %216
    %vm218 = vcmp.lt.s32.totalorder %v91, 127
    %v219 = vsel %vm218, %v215, %v217
    %v220 = vsel %vm218, %v213, %v215
    %v221 = vsel %vm218, %v211, %v213
    %v222 = vsel %vm218, %v217, %v211
    %s223 = scalar_lea.vmem [#allocation7], 5
    %v224 = vld [vmem:[%s223] ss:$8 sm:$0xf]
    %v226 = vperm.slane %v224, 0
    %v227 = vperm.slane %v224, 1
    %v228 = vperm.slane %v224, 2
    %v229 = vperm.slane %v224, 3
    %v234 = vmul.f32 %v221, %v226
    %v235 = vmul.f32 %v220, %v227
    %v236 = vmul.f32 %v219, %v228
    %v237 = vmul.f32 %v222, %v229
    %238 = vrot.lane.b32.xlu0 %v77, 113
    %v239 = vpop.permute.xlu0 %238
    %240 = vrot.lane.b32.xlu0 %v78, 113
    %v241 = vpop.permute.xlu0 %240
    %242 = vrot.lane.b32.xlu0 %v80, 113
    %v243 = vpop.permute.xlu0 %242
    %244 = vrot.lane.b32.xlu0 %v81, 113
    %v245 = vpop.permute.xlu0 %244
    %vm246 = vcmp.lt.s32.totalorder %v91, 113
    %v247 = vsel %vm246, %v243, %v245
    %v248 = vsel %vm246, %v241, %v243
    %v249 = vsel %vm246, %v239, %v241
    %v250 = vsel %vm246, %v245, %v239
    %s251 = scalar_lea.vmem [#allocation7], 6
    %v252 = vld [vmem:[%s251] ss:$8 sm:$0xf]
    %v254 = vperm.slane %v252, 0
    %v255 = vperm.slane %v252, 1
    %v256 = vperm.slane %v252, 2
    %v257 = vperm.slane %v252, 3
    %v262 = vmul.f32 %v249, %v254
    %v263 = vmul.f32 %v248, %v255
    %v264 = vmul.f32 %v247, %v256
    %v265 = vmul.f32 %v250, %v257
    %266 = vrot.lane.b32.xlu0 %v77, 112
    %v267 = vpop.permute.xlu0 %266
    %268 = vrot.lane.b32.xlu0 %v78, 112
    %v269 = vpop.permute.xlu0 %268
    %270 = vrot.lane.b32.xlu0 %v80, 112
    %v271 = vpop.permute.xlu0 %270
    %272 = vrot.lane.b32.xlu0 %v81, 112
    %v273 = vpop.permute.xlu0 %272
    %vm274 = vcmp.lt.s32.totalorder %v91, 112
    %v275 = vsel %vm274, %v271, %v273
    %v276 = vsel %vm274, %v269, %v271
    %v277 = vsel %vm274, %v267, %v269
    %v278 = vsel %vm274, %v273, %v267
    %s279 = scalar_lea.vmem [#allocation7], 7
    %v280 = vld [vmem:[%s279] ss:$8 sm:$0xf]
    %v282 = vperm.slane %v280, 0
    %v283 = vperm.slane %v280, 1
    %v284 = vperm.slane %v280, 2
    %v285 = vperm.slane %v280, 3
    %v290 = vmul.f32 %v277, %v282
    %v291 = vmul.f32 %v276, %v283
    %v292 = vmul.f32 %v275, %v284
    %v293 = vmul.f32 %v278, %v285
    %294 = vrot.lane.b32.xlu0 %v77, 111
    %v295 = vpop.permute.xlu0 %294
    %296 = vrot.lane.b32.xlu0 %v78, 111
    %v297 = vpop.permute.xlu0 %296
    %298 = vrot.lane.b32.xlu0 %v80, 111
    %v299 = vpop.permute.xlu0 %298
    %300 = vrot.lane.b32.xlu0 %v81, 111
    %v301 = vpop.permute.xlu0 %300
    %vm302 = vcmp.lt.s32.totalorder %v91, 111
    %v303 = vsel %vm302, %v299, %v301
    %v304 = vsel %vm302, %v297, %v299
    %v305 = vsel %vm302, %v295, %v297
    %v306 = vsel %vm302, %v301, %v295
    %s307 = scalar_lea.vmem [#allocation7], 32
    %v308 = vld [vmem:[%s307] ss:$8 sm:$0xf]
    %v310 = vperm.slane %v308, 0
    %v311 = vperm.slane %v308, 1
    %v312 = vperm.slane %v308, 2
    %v313 = vperm.slane %v308, 3
    %v318 = vmul.f32 %v305, %v310
    %v319 = vmul.f32 %v304, %v311
    %v320 = vmul.f32 %v303, %v312
    %v321 = vmul.f32 %v306, %v313
    %v322 = vld [vmem:[#allocation5] sm:$0xff]
    %v323 = vld [vmem:[#allocation8] sm:$0xff]
    %v324 = vld [vmem:[#allocation8 + $0x8] sm:$0xff]
    %v325 = vld [vmem:[#allocation8 + $0x10] sm:$0xff]
    %v326 = vld [vmem:[#allocation8 + $0x18] sm:$0xff]
    %vm327 = vcmask 588800
    %v329 = vsel %vm327, %v322, 0
    %331 = vmatpush.msra.mxu0 0.0
    %332 = vmatpush.msra.mxu0 0.0
    %333 = vmatpush.msra.mxu0 0.0
    %334 = vmatpush.msra.mxu0 0.0
    %335 = vmatpush.msra.mxu0 0.0
    %336 = vmatpush.msra.mxu0 0.0
    %337 = vmatpush.msra.mxu0 0.0
    %338 = vmatpush.msra.mxu0 %v318
    %339 = vmatpush.msra.mxu0 %v290
    %340 = vmatpush.msra.mxu0 %v262
    %341 = vmatpush.msra.mxu0 %v234
    %342 = vmatpush.msra.mxu0 %v206
    %343 = vmatpush.msra.mxu0 %v191
    %344 = vmatpush.msra.mxu0 %v163
    %345 = vmatpush.msra.mxu0 %v135
    %346 = vmatpush.msra.mxu0 %v107
    %347 = vmatmul.f32.gmra.mxu0 %v329
    %v348 = vpop.f32.mrf.mxu0
    %v349 = vadd.f32 %v323, %v348
    %350 = vdwg.mxu0
    %351 = vmatpush.msra.mxu0 0.0
    %352 = vmatpush.msra.mxu0 0.0
    %353 = vmatpush.msra.mxu0 0.0
    %354 = vmatpush.msra.mxu0 0.0
    %355 = vmatpush.msra.mxu0 0.0
    %356 = vmatpush.msra.mxu0 0.0
    %357 = vmatpush.msra.mxu0 0.0
    %358 = vmatpush.msra.mxu0 %v319
    %359 = vmatpush.msra.mxu0 %v291
    %360 = vmatpush.msra.mxu0 %v263
    %361 = vmatpush.msra.mxu0 %v235
    %362 = vmatpush.msra.mxu0 %v207
    %363 = vmatpush.msra.mxu0 %v192
    %364 = vmatpush.msra.mxu0 %v164
    %365 = vmatpush.msra.mxu0 %v136
    %366 = vmatpush.msra.mxu0 %v108
    %367 = vmatmul.f32.gmra.mxu0 %v329
    %v368 = vpop.f32.mrf.mxu0
    %v369 = vadd.f32 %v324, %v368
    %370 = vdwg.mxu0
    %371 = vmatpush.msra.mxu0 0.0
    %372 = vmatpush.msra.mxu0 0.0
    %373 = vmatpush.msra.mxu0 0.0
    %374 = vmatpush.msra.mxu0 0.0
    %375 = vmatpush.msra.mxu0 0.0
    %376 = vmatpush.msra.mxu0 0.0
    %377 = vmatpush.msra.mxu0 0.0
    %378 = vmatpush.msra.mxu0 %v320
    %379 = vmatpush.msra.mxu0 %v292
    %380 = vmatpush.msra.mxu0 %v264
    %381 = vmatpush.msra.mxu0 %v236
    %382 = vmatpush.msra.mxu0 %v208
    %383 = vmatpush.msra.mxu0 %v193
    %384 = vmatpush.msra.mxu0 %v165
    %385 = vmatpush.msra.mxu0 %v137
    %386 = vmatpush.msra.mxu0 %v109
    %387 = vmatmul.f32.gmra.mxu0 %v329
    %v388 = vpop.f32.mrf.mxu0
    %v389 = vadd.f32 %v325, %v388
    %390 = vdwg.mxu0
    %391 = vmatpush.msra.mxu0 0.0
    %392 = vmatpush.msra.mxu0 0.0
    %393 = vmatpush.msra.mxu0 0.0
    %394 = vmatpush.msra.mxu0 0.0
    %395 = vmatpush.msra.mxu0 0.0
    %396 = vmatpush.msra.mxu0 0.0
    %397 = vmatpush.msra.mxu0 0.0
    %398 = vmatpush.msra.mxu0 %v321
    %399 = vmatpush.msra.mxu0 %v293
    %400 = vmatpush.msra.mxu0 %v265
    %401 = vmatpush.msra.mxu0 %v237
    %402 = vmatpush.msra.mxu0 %v209
    %403 = vmatpush.msra.mxu0 %v194
    %404 = vmatpush.msra.mxu0 %v166
    %405 = vmatpush.msra.mxu0 %v138
    %406 = vmatpush.msra.mxu0 %v110
    %407 = vmatmul.f32.gmra.mxu0 %v329
    %v408 = vpop.f32.mrf.mxu0
    %v409 = vadd.f32 %v326, %v408
    %410 = vdwg.mxu0
    %411 = vst [vmem:[#allocation10] sm:$0xff] %v349
    %412 = vst [vmem:[#allocation10 + $0x8] sm:$0xff] %v369
    %s413 = scalar_lea.vmem [#allocation10], 16
    %414 = vst [vmem:[%s413] sm:$0xff] %v389
    %415 = vst [vmem:[%s413 + $0x8] sm:$0xff] %v409
    // Predicated region
    $region34: #{tpu_custom_call.1} parent=1 // pred_check
      _
    $region35: #{tpu_custom_call.1} parent=1 // pred_check_branch
      %417 = sbr.rel (0) target = $region37
    $region36: #{tpu_custom_call.1} parent=1 // pred_region
      %419 = vsyncadd [#allocation4], 0
      %s420 = sshll.u32 [#allocation10], 4
      %s421 = int_to_ptr.vmem [resolvable:$true] %s420
      %s422 = sshll.u32 %s4, 4
      %s423 = int_to_ptr.hbm [resolvable:$true] %s422
      %428 = dma.vmem_to_hbm [thread:$0]  %s421, 512, %s423, [#allocation4], 256, 256, 16
    $region37: #{tpu_custom_call.1} parent=1 // pred_fallthru
      _
    // Predicated region
    $region38: #{tpu_custom_call.1} parent=1 // pred_check
      _
    $region39: #{tpu_custom_call.1} parent=1 // pred_check_branch
      %430 = sbr.rel (0) target = $region41
    $region40: #{tpu_custom_call.1} parent=1 // pred_region
      %432 = dma.done [#allocation4], 512
    $region41: #{tpu_custom_call.1} parent=1 // pred_fallthru
      _
    %433 = vsyncpa [#allocation3], 1
    %434 = vsyncpa [#allocation6], 1
    %435 = vsyncpa [#allocation9], 1
    %436 = vsyncpa [#allocation4], 1

</llo_original>
